<compile_context>
chip_gen: v5e
topology: v5e:2x2
jax: 0.10.0
libtpu: 0.0.40
codegen_flags: <defaults>
</compile_context>

<pallas_src>
import jax
import jax.numpy as jnp
from jax.experimental import pallas as pl
from jax.experimental.pallas import tpu as pltpu

_LANE = 128  # TPU vreg lane width


def _dual_cross_attn_kernel(x_ref, w_ref, out_ref):
    # x_ref: (B, 2*S*D + 128) = [cov_flat | tgt_flat | ones-block]
    # w_ref: (2*S*D + 128, P) = [[W_fused | Wv_blk | 0-pad], [bias row], [zeros]]
    # out  : (B, P)           = [fused | ta | ca | 0-pad]   (single unmasked store)
    out_ref[...] = jnp.dot(
        x_ref[...], w_ref[...], preferred_element_type=jnp.float32
    ).astype(out_ref.dtype)


def pack_weights(params, seq_len):
    """One-time packing of the live parameters into a single weight slab.

    Folds in: the seq-mean, the block-diagonal value projections, the fusion
    layer composition (Wv_blk @ Wf), the biases (as an extra affine row block),
    and zero-padding of the output columns to a multiple of 128 lanes.
    """
    D = params["wv_t"].shape[0]
    S = seq_len

    # mean over seq folded into the weight: x_flat @ (tile(W,(S,1))/S) == mean(x) @ W
    mean_fold = lambda w: jnp.tile(w, (S, 1)) / S                       # (S*D, D)
    wv_c_big = mean_fold(params["wv_c"])
    wv_t_big = mean_fold(params["wv_t"])

    zero = jnp.zeros((S * D, D), jnp.float32)
    # x = [cov_flat | tgt_flat]  ->  vcat = [ta | ca]
    wv_blk = jnp.concatenate(
        [jnp.concatenate([wv_c_big, zero], axis=1),
         jnp.concatenate([zero, wv_t_big], axis=1)], axis=0)            # (2SD, 2D)
    bv = jnp.concatenate([params["bv_c"], params["bv_t"]], axis=1)      # (1, 2D)

    wf, bf = params["wf"], params["bf"]                                 # (2D, D), (1, D)
    w_fused = wv_blk @ wf                                               # (2SD, D)
    b_fused = bv @ wf + bf                                              # (1, D)

    # Packed output columns: [fused | ta | ca], zero-padded to P lanes.
    P = max(_LANE, ((3 * D + _LANE - 1) // _LANE) * _LANE)
    pad = P - 3 * D
    w_cols = jnp.pad(jnp.concatenate([w_fused, wv_blk], axis=1), ((0, 0), (0, pad)))
    b_cols = jnp.pad(jnp.concatenate([b_fused, bv], axis=1), ((0, 0), (0, pad)))

    # Bias folded in via a 128-row affine block (x carries ones there):
    # row 0 of the block = packed bias, remaining 127 rows = 0.
    w_slab = jnp.concatenate(
        [w_cols, b_cols, jnp.zeros((_LANE - 1, P), jnp.float32)], axis=0)  # (2SD+128, P)
    return w_slab


@jax.jit
def simple_dual_cross_attention(target_context, covariate_context, w_slab):
    """Pallas forward reproducing SimpleDualCrossAttention.forward (eval mode).

    `w_slab` must come from pack_weights(params, seq_len) with the same seq_len
    as the (possibly singleton) sequence axis of the contexts.
    """
    # TODO(synk): nn.Dropout omitted (eval/inference semantics => identity).
    if target_context.ndim == 2:
        target_context = target_context[:, None, :]
    if covariate_context.ndim == 2:
        covariate_context = covariate_context[:, None, :]

    B, S, D = target_context.shape
    K, P = w_slab.shape                      # K = 2*S*D + 128

    cov_flat = covariate_context.reshape(B, S * D)
    tgt_flat = target_context.reshape(B, S * D)
    ones_blk = jnp.ones((B, K - 2 * S * D), jnp.float32)    # picks up the bias row
    x_slab = jnp.concatenate([cov_flat, tgt_flat, ones_blk], axis=-1)   # (B, K)

    out = pl.pallas_call(
        _dual_cross_attn_kernel,
        out_shape=jax.ShapeDtypeStruct((B, P), jnp.float32),
        in_specs=[pl.BlockSpec(memory_space=pltpu.MemorySpace.VMEM),
                  pl.BlockSpec(memory_space=pltpu.MemorySpace.VMEM)],
        out_specs=pl.BlockSpec(memory_space=pltpu.MemorySpace.VMEM),
    )(x_slab, w_slab)

    fused = out[:, :D]
    ta = out[:, D:2 * D]
    ca = out[:, 2 * D:3 * D]
    return fused, ta, ca


def init_params(key, d_model):
    """Deterministic synthetic parameters (nn.Linear shapes, stored as (in, out))."""
    ks = jax.random.split(key, 14)

    def w(k, n_in, n_out):
        bound = 1.0 / (n_in ** 0.5)
        return jax.random.uniform(k, (n_in, n_out), jnp.float32, -bound, bound)

    def b(k, n_in, n_out):
        bound = 1.0 / (n_in ** 0.5)
        return jax.random.uniform(k, (1, n_out), jnp.float32, -bound, bound)

    D = d_model
    return {
        "wq_t": w(ks[0], D, D),  "bq_t": b(ks[1], D, D),
        "wk_t": w(ks[2], D, D),  "bk_t": b(ks[3], D, D),
        "wv_t": w(ks[4], D, D),  "bv_t": b(ks[5], D, D),
        "wq_c": w(ks[6], D, D),  "bq_c": b(ks[7], D, D),
        "wk_c": w(ks[8], D, D),  "bk_c": b(ks[9], D, D),
        "wv_c": w(ks[10], D, D), "bv_c": b(ks[11], D, D),
        "wf":   w(ks[12], 2 * D, D), "bf": b(ks[13], 2 * D, D),
    }


def reference_forward(tgt, cov, params):
    """Pure-JAX reference mirroring the PyTorch module verbatim (eval mode),
    including the (mathematically dead) Q/K/score/softmax path."""
    D = params["wq_t"].shape[0]
    if tgt.ndim == 3:
        tgt = jnp.mean(tgt, axis=1)
    if cov.ndim == 3:
        cov = jnp.mean(cov, axis=1)
    lin = lambda x, w, b: x @ w + b
    t_q = lin(tgt, params["wq_t"], params["bq_t"])
    c_k = lin(cov, params["wk_c"], params["bk_c"])
    c_v = lin(cov, params["wv_c"], params["bv_c"])
    t_attn = jax.nn.softmax(jnp.sum(t_q * c_k, -1, keepdims=True) / D ** 0.5, axis=-1)
    ta = t_attn * c_v
    c_q = lin(cov, params["wq_c"], params["bq_c"])
    t_k = lin(tgt, params["wk_t"], params["bk_t"])
    t_v = lin(tgt, params["wv_t"], params["bv_t"])
    c_attn = jax.nn.softmax(jnp.sum(c_q * t_k, -1, keepdims=True) / D ** 0.5, axis=-1)
    ca = c_attn * t_v
    fused = jnp.concatenate([ta, ca], axis=-1) @ params["wf"] + params["bf"]
    return fused, ta, ca


if __name__ == "__main__":
    B, S, D = 8, 4, 32
    key = jax.random.PRNGKey(0)
    k_tgt, k_cov, k_par = jax.random.split(key, 3)

    target_context = jax.random.normal(k_tgt, (B, S, D), jnp.float32)
    covariate_context = jax.random.normal(k_cov, (B, S, D), jnp.float32)
    params = init_params(k_par, D)

    # Pack once (cache and reuse across calls); per-call path is only the
    # jitted forward with its single 2-operand, grid-less pallas_call.
    w_slab = jax.block_until_ready(pack_weights(params, seq_len=S))

    fused, ta, ca = simple_dual_cross_attention(
        target_context, covariate_context, w_slab)
    jax.block_until_ready((fused, ta, ca))

    fused_r, ta_r, ca_r = reference_forward(target_context, covariate_context, params)
    assert jnp.allclose(fused, fused_r, atol=1e-5, rtol=1e-5)
    assert jnp.allclose(ta, ta_r, atol=1e-5, rtol=1e-5)
    assert jnp.allclose(ca, ca_r, atol=1e-5, rtol=1e-5)

    print("KERNEL_OK")
</pallas_src>

<mosaic_0001>
module attributes {stable_mosaic.version = 11 : i64} {
  func.func @_dual_cross_attn_kernel(%arg0: memref<8x384xf32, #tpu.memory_space<vmem>>, %arg1: memref<384x128xf32, #tpu.memory_space<vmem>>, %arg2: memref<8x128xf32, #tpu.memory_space<vmem>>) attributes {dimension_semantics = [], scalar_prefetch = 0 : i64, scratch_operands = 0 : i64, tpu.core_type = #tpu.core_type<tc>} {
    %c0 = arith.constant 0 : index
    %c0_0 = arith.constant 0 : index
    %0 = vector.load %arg0[%c0, %c0_0] : memref<8x384xf32, #tpu.memory_space<vmem>>, vector<8x384xf32>
    %c0_1 = arith.constant 0 : index
    %c0_2 = arith.constant 0 : index
    %1 = vector.load %arg1[%c0_1, %c0_2] : memref<384x128xf32, #tpu.memory_space<vmem>>, vector<384x128xf32>
    %cst = arith.constant dense<0.000000e+00> : vector<8x128xf32>
    %2 = tpu.matmul %0, %1, %cst {dimension_numbers = #tpu.dot_dimension_numbers<[1], [0], [0], [1], [0, 0, 1, 1], [], []>} : vector<8x384xf32>, vector<384x128xf32>, vector<8x128xf32> -> vector<8x128xf32>
    %c0_3 = arith.constant 0 : index
    %c0_4 = arith.constant 0 : index
    %3 = vector.load %arg2[%c0_3, %c0_4] : memref<8x128xf32, #tpu.memory_space<vmem>>, vector<8x128xf32>
    tpu.vector_store %arg2[%c0_3, %c0_4], %2 {strides = array<i32>} : memref<8x128xf32, #tpu.memory_space<vmem>>, vector<8x128xf32>,
    return
  }
}

</mosaic_0001>

<llo_original>
// kernel: simple_dual_cross_attention.1
$region0: #{simple_dual_cross_attention.1}
  #allocation0 [shape = 'u32[]', space=smem, size = 0x4, offset = 0x4, fixed_abs, tag = 'smem constant byte address 0x4 - core index']
  #allocation1 [shape = 'u32[72,128]{1,0:T(1,128)}', space=vmem, size = 0x9000, scoped, tag = 'internal scratch']
  %s0 = inlined_call_operand.vmem [shape: f32[8,384], index: 0, kind: input, shape index: {}]
  %s1 = inlined_call_operand.hbm [shape: f32[384,128], index: 1, kind: input, shape index: {}]
  %s2 = inlined_call_operand.vmem [shape: f32[8,128], index: 2, kind: output, shape index: {}]
  %s3 = sld [smem:[#allocation0]]
  $region22: #{simple_dual_cross_attention.1} parent=0
    _
  %s5 = ssub.s32 1, %s3
  %s6 = scalar_select 0, %s5, %s3
  $region1: #{simple_dual_cross_attention.1} parent=0
    #allocation2 [shape = 'u8[196608]{0}', space=vmem, size = 0x30000, scoped, tag = 'input window, operand 1, single buffered']
    #allocation3 [shape = 's32[1]{0}', space=sflag, size = 0x4, scoped, tag = 'scoped memory for simple_dual_cross_attention.1']
    %7 = vsyncpa [#allocation3], 0
    // Predicated region
    $region2: #{simple_dual_cross_attention.1} parent=1 // pred_check
      _
    $region3: #{simple_dual_cross_attention.1} parent=1 // pred_check_branch
      %9 = sbr.rel (0) target = $region5
    $region4: #{simple_dual_cross_attention.1} parent=1 // pred_region
      _
    $region5: #{simple_dual_cross_attention.1} parent=1 // pred_fallthru
      _
    // Predicated region
    $region6: #{simple_dual_cross_attention.1} parent=1 // pred_check
      _
    $region7: #{simple_dual_cross_attention.1} parent=1 // pred_check_branch
      %11 = sbr.rel (0) target = $region9
    $region8: #{simple_dual_cross_attention.1} parent=1 // pred_region
      %13 = vsyncadd [#allocation3], 0
      %s14 = sshll.u32 %s1, 4
      %s15 = int_to_ptr.hbm [resolvable:$true] %s14
      %s16 = sshll.u32 [#allocation2], 4
      %s17 = int_to_ptr.vmem [resolvable:$true] %s16
      %22 = dma.hbm_to_vmem [thread:$0]  %s15, 6144, %s17, [#allocation3], 128, 128, 8
    $region9: #{simple_dual_cross_attention.1} parent=1 // pred_fallthru
      _
    // Predicated region
    $region10: #{simple_dual_cross_attention.1} parent=1 // pred_check
      _
    $region11: #{simple_dual_cross_attention.1} parent=1 // pred_check_branch
      %24 = sbr.rel (0) target = $region13
    $region12: #{simple_dual_cross_attention.1} parent=1 // pred_region
      %26 = dma.done [#allocation3], 6144
    $region13: #{simple_dual_cross_attention.1} parent=1 // pred_fallthru
      _
    %v27 = vld [vmem:[%s0] sm:$0xff]
    %v28 = vld [vmem:[%s0 + $0x8] sm:$0xff]
    %v29 = vld [vmem:[%s0 + $0x10] sm:$0xff]
    %v30 = vld [vmem:[#allocation2] sm:$0xff]
    %v31 = vld [vmem:[#allocation2 + $0x8] sm:$0xff]
    %v32 = vld [vmem:[#allocation2 + $0x10] sm:$0xff]
    %v33 = vld [vmem:[#allocation2 + $0x18] sm:$0xff]
    %v34 = vld [vmem:[#allocation2 + $0x20] sm:$0xff]
    %v35 = vld [vmem:[#allocation2 + $0x28] sm:$0xff]
    %v36 = vld [vmem:[#allocation2 + $0x30] sm:$0xff]
    %v37 = vld [vmem:[#allocation2 + $0x38] sm:$0xff]
    %v38 = vld [vmem:[#allocation2 + $0x40] sm:$0xff]
    %v39 = vld [vmem:[#allocation2 + $0x48] sm:$0xff]
    %v40 = vld [vmem:[#allocation2 + $0x50] sm:$0xff]
    %v41 = vld [vmem:[#allocation2 + $0x58] sm:$0xff]
    %v42 = vld [vmem:[#allocation2 + $0x60] sm:$0xff]
    %v43 = vld [vmem:[#allocation2 + $0x68] sm:$0xff]
    %v44 = vld [vmem:[#allocation2 + $0x70] sm:$0xff]
    %v45 = vld [vmem:[#allocation2 + $0x78] sm:$0xff]
    %v46 = vld [vmem:[#allocation2 + $0x80] sm:$0xff]
    %v47 = vld [vmem:[#allocation2 + $0x88] sm:$0xff]
    %v48 = vld [vmem:[#allocation2 + $0x90] sm:$0xff]
    %v49 = vld [vmem:[#allocation2 + $0x98] sm:$0xff]
    %v50 = vld [vmem:[#allocation2 + $0xa0] sm:$0xff]
    %v51 = vld [vmem:[#allocation2 + $0xa8] sm:$0xff]
    %v52 = vld [vmem:[#allocation2 + $0xb0] sm:$0xff]
    %v53 = vld [vmem:[#allocation2 + $0xb8] sm:$0xff]
    %v54 = vld [vmem:[#allocation2 + $0xc0] sm:$0xff]
    %v55 = vld [vmem:[#allocation2 + $0xc8] sm:$0xff]
    %v56 = vld [vmem:[#allocation2 + $0xd0] sm:$0xff]
    %v57 = vld [vmem:[#allocation2 + $0xd8] sm:$0xff]
    %v58 = vld [vmem:[#allocation2 + $0xe0] sm:$0xff]
    %v59 = vld [vmem:[#allocation2 + $0xe8] sm:$0xff]
    %v60 = vld [vmem:[#allocation2 + $0xf0] sm:$0xff]
    %v61 = vld [vmem:[#allocation2 + $0xf8] sm:$0xff]
    %v62 = vld [vmem:[#allocation2 + $0x100] sm:$0xff]
    %v63 = vld [vmem:[#allocation2 + $0x108] sm:$0xff]
    %v64 = vld [vmem:[#allocation2 + $0x110] sm:$0xff]
    %v65 = vld [vmem:[#allocation2 + $0x118] sm:$0xff]
    %v66 = vld [vmem:[#allocation2 + $0x120] sm:$0xff]
    %v67 = vld [vmem:[#allocation2 + $0x128] sm:$0xff]
    %v68 = vld [vmem:[#allocation2 + $0x130] sm:$0xff]
    %v69 = vld [vmem:[#allocation2 + $0x138] sm:$0xff]
    %v70 = vld [vmem:[#allocation2 + $0x140] sm:$0xff]
    %v71 = vld [vmem:[#allocation2 + $0x148] sm:$0xff]
    %v72 = vld [vmem:[#allocation2 + $0x150] sm:$0xff]
    %v73 = vld [vmem:[#allocation2 + $0x158] sm:$0xff]
    %v74 = vld [vmem:[#allocation2 + $0x160] sm:$0xff]
    %v75 = vld [vmem:[#allocation2 + $0x168] sm:$0xff]
    %v76 = vld [vmem:[#allocation2 + $0x170] sm:$0xff]
    %v77 = vld [vmem:[#allocation2 + $0x178] sm:$0xff]
    %78 = vmatpush.msra.mxu0 %v45
    %79 = vmatpush.msra.mxu0 %v44
    %80 = vmatpush.msra.mxu0 %v43
    %81 = vmatpush.msra.mxu0 %v42
    %82 = vmatpush.msra.mxu0 %v41
    %83 = vmatpush.msra.mxu0 %v40
    %84 = vmatpush.msra.mxu0 %v39
    %85 = vmatpush.msra.mxu0 %v38
    %86 = vmatpush.msra.mxu0 %v37
    %87 = vmatpush.msra.mxu0 %v36
    %88 = vmatpush.msra.mxu0 %v35
    %89 = vmatpush.msra.mxu0 %v34
    %90 = vmatpush.msra.mxu0 %v33
    %91 = vmatpush.msra.mxu0 %v32
    %92 = vmatpush.msra.mxu0 %v31
    %93 = vmatpush.msra.mxu0 %v30
    %94 = vmatmul.f32.gmra.mxu0 %v27
    %v95 = vpop.f32.mrf.mxu0
    %v96 = vadd.f32 0.0, %v95
    %97 = vdwg.mxu0
    %98 = vmatpush.msra.mxu0 %v61
    %99 = vmatpush.msra.mxu0 %v60
    %100 = vmatpush.msra.mxu0 %v59
    %101 = vmatpush.msra.mxu0 %v58
    %102 = vmatpush.msra.mxu0 %v57
    %103 = vmatpush.msra.mxu0 %v56
    %104 = vmatpush.msra.mxu0 %v55
    %105 = vmatpush.msra.mxu0 %v54
    %106 = vmatpush.msra.mxu0 %v53
    %107 = vmatpush.msra.mxu0 %v52
    %108 = vmatpush.msra.mxu0 %v51
    %109 = vmatpush.msra.mxu0 %v50
    %110 = vmatpush.msra.mxu0 %v49
    %111 = vmatpush.msra.mxu0 %v48
    %112 = vmatpush.msra.mxu0 %v47
    %113 = vmatpush.msra.mxu0 %v46
    %114 = vmatmul.f32.gmra.mxu0 %v28
    %v115 = vpop.f32.mrf.mxu0
    %v116 = vadd.f32 %v96, %v115
    %117 = vdwg.mxu0
    %118 = vmatpush.msra.mxu0 %v77
    %119 = vmatpush.msra.mxu0 %v76
    %120 = vmatpush.msra.mxu0 %v75
    %121 = vmatpush.msra.mxu0 %v74
    %122 = vmatpush.msra.mxu0 %v73
    %123 = vmatpush.msra.mxu0 %v72
    %124 = vmatpush.msra.mxu0 %v71
    %125 = vmatpush.msra.mxu0 %v70
    %126 = vmatpush.msra.mxu0 %v69
    %127 = vmatpush.msra.mxu0 %v68
    %128 = vmatpush.msra.mxu0 %v67
    %129 = vmatpush.msra.mxu0 %v66
    %130 = vmatpush.msra.mxu0 %v65
    %131 = vmatpush.msra.mxu0 %v64
    %132 = vmatpush.msra.mxu0 %v63
    %133 = vmatpush.msra.mxu0 %v62
    %134 = vmatmul.f32.gmra.mxu0 %v29
    %v135 = vpop.f32.mrf.mxu0
    %v136 = vadd.f32 %v116, %v135
    %137 = vdwg.mxu0
    %138 = vst [vmem:[%s2] sm:$0xff] %v136
    // Predicated region
    $region14: #{simple_dual_cross_attention.1} parent=1 // pred_check
      _
    $region15: #{simple_dual_cross_attention.1} parent=1 // pred_check_branch
      %140 = sbr.rel (0) target = $region17
    $region16: #{simple_dual_cross_attention.1} parent=1 // pred_region
      _
    $region17: #{simple_dual_cross_attention.1} parent=1 // pred_fallthru
      _
    // Predicated region
    $region18: #{simple_dual_cross_attention.1} parent=1 // pred_check
      _
    $region19: #{simple_dual_cross_attention.1} parent=1 // pred_check_branch
      %142 = sbr.rel (0) target = $region21
    $region20: #{simple_dual_cross_attention.1} parent=1 // pred_region
      _
    $region21: #{simple_dual_cross_attention.1} parent=1 // pred_fallthru
      _
    %143 = vsyncpa [#allocation3], 1

</llo_original>
